<compile_context>
chip_gen: v6e
topology: v6e:2x2x1
jax: 0.10.0
libtpu: 0.0.40
codegen_flags: <defaults>
</compile_context>

<pallas_src>
import jax
import jax.numpy as jnp
from jax.experimental import pallas as pl
from jax.experimental.pallas import tpu as pltpu

# ----------------------------- problem sizes -----------------------------
B = 2        # batch
P = 8        # number of PARSEC parameters
K = 8        # number of keypoints
N = 10 * K   # dense airfoil points (so refine_forward's [:, ::10] works)
H = 32       # MLP hidden width

DIN_A = 2 * P + 2 * K    # modelA input : source_param ++ target_param ++ keypoints(xy) = 32
DOUT_A = 2 * K           # modelA output: target keypoints (x,y)                        = 16
DIN_B = 2 * (P + K)      # modelB input : flattened condition                           = 32
DOUT_B = 2 * N           # modelB output: dense points (x,y)                            = 160

BP = 8                   # batch padded to one full sublane group
X_LANES = 128            # activation slab lane width (>= DIN_A)
KP_PAD = 128             # lane-dense modelA output width
PT_PAD = 256             # lane-dense modelB output width
OUT_COLS = KP_PAD + PT_PAD          # merged output width = 384
SLAB_ROWS = 408                     # packed parameter slab rows (see layout below)
SLAB_COLS = 256                     # packed parameter slab lanes

# Parameter-slab layout (all offsets 8-sublane / 128-lane aligned):
#   rows   0..127, cols   0..127 : A_W1   (X lanes -> hidden), nonzero [0:32, 0:32]
#   rows   0..127, cols 128..255 : B_W1c  (X tp-lanes -> hidden, expand folded), nonzero [8:16, 0:32]
#   rows 128..255, cols   0..127 : B_W1k  (kp lanes -> hidden), nonzero [0:16, 0:32]
#   rows 128..255, cols 128..255 : A_W2   (hidden -> kp out),   nonzero [0:32, 0:16]
#   rows 256..383, cols   0..255 : B_W2   (hidden -> pt out),   nonzero [0:32, 0:160]
#   rows 384..391, cols   0..127 : A_b1  (pre-broadcast to 8 rows)
#   rows 384..391, cols 128..255 : B_b1
#   rows 392..399, cols   0..127 : A_b2
#   rows 400..407, cols   0..255 : B_b2


# ------------------------------ Pallas kernel -----------------------------
def _fused_kernel(x_ref, w_ref, out_ref):
    """Fused: modelA MLP -> condition -> modelB MLP, f32 accumulation.

    x_ref  : (BP, 128) activation slab  [sp | tp | kp | 0-pad]
    w_ref  : (408, 256) packed parameter slab (layout above)
    out_ref: (BP, 384) merged lane-dense output [kp_pad | pt_pad]
    """
    f32 = jnp.float32
    x = x_ref[...]                                   # (8, 128)

    # Static, tile-aligned carves of the parameter slab (clean full-vreg loads).
    a_w1 = w_ref[0:128, 0:128]
    b_w1c = w_ref[0:128, 128:256]
    b_w1k = w_ref[128:256, 0:128]
    a_w2 = w_ref[128:256, 128:256]
    b_w2 = w_ref[256:384, 0:256]
    a_b1 = w_ref[384:392, 0:128]
    b_b1 = w_ref[384:392, 128:256]
    a_b2 = w_ref[392:400, 0:128]
    b_b2 = w_ref[400:408, 0:256]

    # ---- modelA: relu(x_a @ A_W1 + b1) @ A_W2 + b2 (concat folded into slab).
    h_a = jnp.maximum(jnp.dot(x, a_w1, preferred_element_type=f32) + a_b1, 0.0)
    kp_pad = jnp.dot(h_a, a_w2, preferred_element_type=f32) + a_b2   # (8, 128)

    # ---- modelB: condition = [tp expanded | keypoint_pred], both folded into
    # matmuls against zero-padded slab blocks (no concat, no repeat).
    h_b = jnp.maximum(jnp.dot(x, b_w1c, preferred_element_type=f32)
                      + jnp.dot(kp_pad, b_w1k, preferred_element_type=f32)
                      + b_b1, 0.0)
    pt_pad = jnp.dot(h_b, b_w2, preferred_element_type=f32) + b_b2   # (8, 256)

    # Single merged output, both sub-stores 128-lane aligned (unmasked vst).
    out_ref[:, 0:KP_PAD] = kp_pad
    out_ref[:, KP_PAD:OUT_COLS] = pt_pad


def _vmem_spec():
    # Full-array VMEM block: no index_map, no (8,128) surprises, single DMA each.
    return pl.BlockSpec(memory_space=pltpu.MemorySpace.VMEM)


def fused_forward_pallas(x_slab, w_slab):
    """One pallas_call, two input DMAs, one output DMA."""
    return pl.pallas_call(
        _fused_kernel,
        out_shape=jax.ShapeDtypeStruct((BP, OUT_COLS), jnp.float32),
        in_specs=[_vmem_spec(), _vmem_spec()],
        out_specs=_vmem_spec(),
    )(x_slab, w_slab)


# --------------------------- deterministic params --------------------------
def _init_params():
    """Random placeholder MLP weights + packing into the single kernel slab."""
    key = jax.random.PRNGKey(0)
    ks = jax.random.split(key, 8)
    scale = 0.1
    raw = {
        "A_w1": scale * jax.random.normal(ks[0], (DIN_A, H), jnp.float32),
        "A_b1": scale * jax.random.normal(ks[1], (H,), jnp.float32),
        "A_w2": scale * jax.random.normal(ks[2], (H, DOUT_A), jnp.float32),
        "A_b2": scale * jax.random.normal(ks[3], (DOUT_A,), jnp.float32),
        "B_w1": scale * jax.random.normal(ks[4], (DIN_B, H), jnp.float32),
        "B_b1": scale * jax.random.normal(ks[5], (H,), jnp.float32),
        "B_w2": scale * jax.random.normal(ks[6], (H, DOUT_B), jnp.float32),
        "B_b2": scale * jax.random.normal(ks[7], (DOUT_B,), jnp.float32),
    }

    # Fold target_param.expand(-1,-1,2): condition rows 2i and 2i+1 both carry
    # param i, so the folded first-layer row i = B_w1[2i] + B_w1[2i+1].
    b_w1_fold = raw["B_w1"][0:2 * P:2] + raw["B_w1"][1:2 * P:2]   # (P, H)

    slab = jnp.zeros((SLAB_ROWS, SLAB_COLS), jnp.float32)
    slab = slab.at[0:DIN_A, 0:H].set(raw["A_w1"])                           # A_W1
    slab = slab.at[P:2 * P, 128:128 + H].set(b_w1_fold)                     # B_W1c (folded)
    slab = slab.at[128:128 + 2 * K, 0:H].set(raw["B_w1"][2 * P:])           # B_W1k
    slab = slab.at[128:128 + H, 128:128 + DOUT_A].set(raw["A_w2"])          # A_W2
    slab = slab.at[256:256 + H, 0:DOUT_B].set(raw["B_w2"])                  # B_W2
    slab = slab.at[384:392, 0:H].set(jnp.broadcast_to(raw["A_b1"], (BP, H)))
    slab = slab.at[384:392, 128:128 + H].set(jnp.broadcast_to(raw["B_b1"], (BP, H)))
    slab = slab.at[392:400, 0:DOUT_A].set(jnp.broadcast_to(raw["A_b2"], (BP, DOUT_A)))
    slab = slab.at[400:408, 0:DOUT_B].set(jnp.broadcast_to(raw["B_b2"], (BP, DOUT_B)))
    return slab, raw


# ------------------------------- forward ----------------------------------
def ae_ab_parsec_forward(w_slab, source_param, target_param, source_keypoint):
    """Mirrors AE_AB_Parsec.forward:
       returns (target_keypoint_pred, target_point_pred)."""
    b = source_param.shape[0]
    assert b <= BP, "batch must fit the padded sublane group (add a grid to batch more)"

    sp = source_param.reshape(b, P)
    tp = target_param.reshape(b, P)
    kp = source_keypoint.reshape(b, 2 * K)
    # One activation slab: [sp | tp | kp | zero-pad] -> (BP, 128).
    x = jnp.concatenate([sp, tp, kp], axis=1)                     # (b, 32)
    x = jnp.pad(x, ((0, BP - b), (0, X_LANES - DIN_A)))           # (8, 128)

    # TODO(synk): modelA/modelB are placeholder 2-layer MLPs (the real
    # architectures are not defined in the spec), and modelB.sample is a
    # deterministic mean decode — no latent noise draw.
    out = fused_forward_pallas(x, w_slab)                         # (8, 384)

    target_keypoint_pred = out[:b, :DOUT_A].reshape(b, K, 2)
    target_point_pred = out[:b, KP_PAD:KP_PAD + DOUT_B].reshape(b, N, 2)
    return target_keypoint_pred, target_point_pred


# --------------------------- pure-JAX reference -----------------------------
def _reference_forward(raw, source_param, target_param, source_keypoint):
    """Direct translation of the PyTorch forward (placeholder MLPs)."""
    b = source_param.shape[0]
    hp = jax.lax.Precision.HIGHEST
    sp = source_param.reshape(b, P)
    tp = target_param.reshape(b, P)
    kp = source_keypoint.reshape(b, 2 * K)
    x_a = jnp.concatenate([sp, tp, kp], axis=1)
    h = jnp.maximum(jnp.dot(x_a, raw["A_w1"], precision=hp) + raw["A_b1"], 0.0)
    kp_pred = jnp.dot(h, raw["A_w2"], precision=hp) + raw["A_b2"]             # (b, 16)
    cond = jnp.concatenate([jnp.repeat(tp, 2, axis=1), kp_pred], axis=1)      # expand(-1,-1,2) + cat
    h2 = jnp.maximum(jnp.dot(cond, raw["B_w1"], precision=hp) + raw["B_b1"], 0.0)
    pt_pred = jnp.dot(h2, raw["B_w2"], precision=hp) + raw["B_b2"]            # (b, 160)
    return kp_pred.reshape(b, K, 2), pt_pred.reshape(b, N, 2)


# -------------------------------- main -------------------------------------
if __name__ == "__main__":
    w_slab, raw = _init_params()

    key = jax.random.PRNGKey(0)
    k1, k2, k3 = jax.random.split(key, 3)
    source_param = jax.random.normal(k1, (B, P, 1), jnp.float32)
    target_param = jax.random.normal(k2, (B, P, 1), jnp.float32)
    source_keypoint = jax.random.normal(k3, (B, K, 2), jnp.float32)

    fwd = jax.jit(ae_ab_parsec_forward)
    target_keypoint_pred, target_point_pred = fwd(
        w_slab, source_param, target_param, source_keypoint
    )
    jax.block_until_ready((target_keypoint_pred, target_point_pred))

    assert target_keypoint_pred.shape == (B, K, 2)
    assert target_point_pred.shape == (B, N, 2)
    assert bool(jnp.all(jnp.isfinite(target_keypoint_pred)))
    assert bool(jnp.all(jnp.isfinite(target_point_pred)))

    # Numerical check vs. the pure-JAX reference (validates the expand-folding
    # and all zero-padding tricks).
    kp_ref, pt_ref = _reference_forward(raw, source_param, target_param, source_keypoint)
    assert float(jnp.max(jnp.abs(target_keypoint_pred - kp_ref))) < 1e-3
    assert float(jnp.max(jnp.abs(target_point_pred - pt_ref))) < 1e-3

    print("KERNEL_OK")
</pallas_src>

<mosaic_0001>
module attributes {stable_mosaic.version = 11 : i64} {
  func.func @_fused_kernel(%arg0: memref<8x128xf32, #tpu.memory_space<vmem>>, %arg1: memref<408x256xf32, #tpu.memory_space<vmem>>, %arg2: memref<8x384xf32, #tpu.memory_space<vmem>>) attributes {dimension_semantics = [], scalar_prefetch = 0 : i64, scratch_operands = 0 : i64, tpu.core_type = #tpu.core_type<tc>} {
    %c0 = arith.constant 0 : index
    %c0_0 = arith.constant 0 : index
    %0 = vector.load %arg0[%c0, %c0_0] : memref<8x128xf32, #tpu.memory_space<vmem>>, vector<8x128xf32>
    %c0_1 = arith.constant 0 : index
    %c0_2 = arith.constant 0 : index
    %1 = vector.load %arg1[%c0_1, %c0_2] : memref<408x256xf32, #tpu.memory_space<vmem>>, vector<128x128xf32>
    %c0_3 = arith.constant 0 : index
    %c128 = arith.constant 128 : index
    %2 = vector.load %arg1[%c0_3, %c128] : memref<408x256xf32, #tpu.memory_space<vmem>>, vector<128x128xf32>
    %c128_4 = arith.constant 128 : index
    %c0_5 = arith.constant 0 : index
    %3 = vector.load %arg1[%c128_4, %c0_5] : memref<408x256xf32, #tpu.memory_space<vmem>>, vector<128x128xf32>
    %c128_6 = arith.constant 128 : index
    %c128_7 = arith.constant 128 : index
    %4 = vector.load %arg1[%c128_6, %c128_7] : memref<408x256xf32, #tpu.memory_space<vmem>>, vector<128x128xf32>
    %c256 = arith.constant 256 : index
    %c0_8 = arith.constant 0 : index
    %5 = vector.load %arg1[%c256, %c0_8] : memref<408x256xf32, #tpu.memory_space<vmem>>, vector<128x256xf32>
    %c384 = arith.constant 384 : index
    %c0_9 = arith.constant 0 : index
    %6 = vector.load %arg1[%c384, %c0_9] : memref<408x256xf32, #tpu.memory_space<vmem>>, vector<8x128xf32>
    %c384_10 = arith.constant 384 : index
    %c128_11 = arith.constant 128 : index
    %7 = vector.load %arg1[%c384_10, %c128_11] : memref<408x256xf32, #tpu.memory_space<vmem>>, vector<8x128xf32>
    %c392 = arith.constant 392 : index
    %c0_12 = arith.constant 0 : index
    %8 = vector.load %arg1[%c392, %c0_12] : memref<408x256xf32, #tpu.memory_space<vmem>>, vector<8x128xf32>
    %c400 = arith.constant 400 : index
    %c0_13 = arith.constant 0 : index
    %9 = vector.load %arg1[%c400, %c0_13] : memref<408x256xf32, #tpu.memory_space<vmem>>, vector<8x256xf32>
    %cst = arith.constant dense<0.000000e+00> : vector<8x128xf32>
    %10 = tpu.matmul %0, %1, %cst {dimension_numbers = #tpu.dot_dimension_numbers<[1], [0], [0], [1], [0, 0, 1, 1], [], []>} : vector<8x128xf32>, vector<128x128xf32>, vector<8x128xf32> -> vector<8x128xf32>
    %11 = arith.addf %10, %6 : vector<8x128xf32>
    %cst_14 = arith.constant 0.000000e+00 : f32
    %12 = vector.broadcast %cst_14 : f32 to vector<8x128xf32>
    %13 = arith.maximumf %11, %12 : vector<8x128xf32>
    %cst_15 = arith.constant dense<0.000000e+00> : vector<8x128xf32>
    %14 = tpu.matmul %13, %4, %cst_15 {dimension_numbers = #tpu.dot_dimension_numbers<[1], [0], [0], [1], [0, 0, 1, 1], [], []>} : vector<8x128xf32>, vector<128x128xf32>, vector<8x128xf32> -> vector<8x128xf32>
    %15 = arith.addf %14, %8 : vector<8x128xf32>
    %cst_16 = arith.constant dense<0.000000e+00> : vector<8x128xf32>
    %16 = tpu.matmul %0, %2, %cst_16 {dimension_numbers = #tpu.dot_dimension_numbers<[1], [0], [0], [1], [0, 0, 1, 1], [], []>} : vector<8x128xf32>, vector<128x128xf32>, vector<8x128xf32> -> vector<8x128xf32>
    %cst_17 = arith.constant dense<0.000000e+00> : vector<8x128xf32>
    %17 = tpu.matmul %15, %3, %cst_17 {dimension_numbers = #tpu.dot_dimension_numbers<[1], [0], [0], [1], [0, 0, 1, 1], [], []>} : vector<8x128xf32>, vector<128x128xf32>, vector<8x128xf32> -> vector<8x128xf32>
    %18 = arith.addf %16, %17 : vector<8x128xf32>
    %19 = arith.addf %18, %7 : vector<8x128xf32>
    %cst_18 = arith.constant 0.000000e+00 : f32
    %20 = vector.broadcast %cst_18 : f32 to vector<8x128xf32>
    %21 = arith.maximumf %19, %20 : vector<8x128xf32>
    %cst_19 = arith.constant dense<0.000000e+00> : vector<8x256xf32>
    %22 = tpu.matmul %21, %5, %cst_19 {dimension_numbers = #tpu.dot_dimension_numbers<[1], [0], [0], [1], [0, 0, 1, 1], [], []>} : vector<8x128xf32>, vector<128x256xf32>, vector<8x256xf32> -> vector<8x256xf32>
    %23 = arith.addf %22, %9 : vector<8x256xf32>
    %c0_20 = arith.constant 0 : index
    %c0_21 = arith.constant 0 : index
    %24 = vector.load %arg2[%c0_20, %c0_21] : memref<8x384xf32, #tpu.memory_space<vmem>>, vector<8x128xf32>
    tpu.vector_store %arg2[%c0_20, %c0_21], %15 {strides = array<i32>} : memref<8x384xf32, #tpu.memory_space<vmem>>, vector<8x128xf32>,
    %c0_22 = arith.constant 0 : index
    %c128_23 = arith.constant 128 : index
    %25 = vector.load %arg2[%c0_22, %c128_23] : memref<8x384xf32, #tpu.memory_space<vmem>>, vector<8x256xf32>
    tpu.vector_store %arg2[%c0_22, %c128_23], %23 {strides = array<i32>} : memref<8x384xf32, #tpu.memory_space<vmem>>, vector<8x256xf32>,
    return
  }
}

</mosaic_0001>

<llo_original>
// kernel: ae_ab_parsec_forward.1
$region0: #{ae_ab_parsec_forward.1}
  #allocation0 [shape = 'u32[]', space=smem, size = 0x4, offset = 0x4, fixed_abs, tag = 'smem constant byte address 0x4 - core index']
  #allocation1 [shape = 'u32[144,128]{1,0:T(1,128)}', space=vmem, size = 0x12000, scoped, tag = 'internal scratch']
  %s0 = inlined_call_operand.vmem [shape: f32[8,128], index: 0, kind: input, shape index: {}]
  %s1 = inlined_call_operand.hbm [shape: f32[408,256], index: 1, kind: input, shape index: {}]
  %s2 = inlined_call_operand.vmem [shape: f32[8,384], index: 2, kind: output, shape index: {}]
  %s3 = sld [smem:[#allocation0]]
  $region22: #{ae_ab_parsec_forward.1} parent=0
    _
  %s5 = ssub.s32 1, %s3
  %s6 = scalar_select 0, %s5, %s3
  $region1: #{ae_ab_parsec_forward.1} parent=0
    #allocation2 [shape = 'u8[417792]{0}', space=vmem, size = 0x66000, scoped, tag = 'input window, operand 1, single buffered']
    #allocation3 [shape = 's32[1]{0}', space=sflag, size = 0x4, scoped, tag = 'scoped memory for ae_ab_parsec_forward.1']
    %7 = vsyncpa [#allocation3], 0
    // Predicated region
    $region2: #{ae_ab_parsec_forward.1} parent=1 // pred_check
      _
    $region3: #{ae_ab_parsec_forward.1} parent=1 // pred_check_branch
      %9 = sbr.rel (0) target = $region5
    $region4: #{ae_ab_parsec_forward.1} parent=1 // pred_region
      _
    $region5: #{ae_ab_parsec_forward.1} parent=1 // pred_fallthru
      _
    // Predicated region
    $region6: #{ae_ab_parsec_forward.1} parent=1 // pred_check
      _
    $region7: #{ae_ab_parsec_forward.1} parent=1 // pred_check_branch
      %11 = sbr.rel (0) target = $region9
    $region8: #{ae_ab_parsec_forward.1} parent=1 // pred_region
      %s13 = ssub.s32 13056, 13056
      %14 = vsyncadd [#allocation3], %s13
      %s15 = sshll.u32 [#allocation2], 4
      %s16 = int_to_ptr.vmem [resolvable:$true] %s15
      %21 = dma.hbm_to_vmem [thread:$0]  %s1, 13056, %s16, [#allocation3], 256, 256, 16
    $region9: #{ae_ab_parsec_forward.1} parent=1 // pred_fallthru
      _
    // Predicated region
    $region10: #{ae_ab_parsec_forward.1} parent=1 // pred_check
      _
    $region11: #{ae_ab_parsec_forward.1} parent=1 // pred_check_branch
      %23 = sbr.rel (0) target = $region13
    $region12: #{ae_ab_parsec_forward.1} parent=1 // pred_region
      %24 = dma.done [#allocation3], 13056
    $region13: #{ae_ab_parsec_forward.1} parent=1 // pred_fallthru
      _
    %v25 = vld [vmem:[%s0] sm:$0xff]
    %v26 = vld [vmem:[#allocation2] sm:$0xff]
    %v27 = vld [vmem:[#allocation2 + $0x10] sm:$0xff]
    %v28 = vld [vmem:[#allocation2 + $0x20] sm:$0xff]
    %v29 = vld [vmem:[#allocation2 + $0x30] sm:$0xff]
    %v30 = vld [vmem:[#allocation2 + $0x40] sm:$0xff]
    %v31 = vld [vmem:[#allocation2 + $0x50] sm:$0xff]
    %v32 = vld [vmem:[#allocation2 + $0x60] sm:$0xff]
    %v33 = vld [vmem:[#allocation2 + $0x70] sm:$0xff]
    %v34 = vld [vmem:[#allocation2 + $0x80] sm:$0xff]
    %v35 = vld [vmem:[#allocation2 + $0x90] sm:$0xff]
    %v36 = vld [vmem:[#allocation2 + $0xa0] sm:$0xff]
    %v37 = vld [vmem:[#allocation2 + $0xb0] sm:$0xff]
    %v38 = vld [vmem:[#allocation2 + $0xc0] sm:$0xff]
    %v39 = vld [vmem:[#allocation2 + $0xd0] sm:$0xff]
    %v40 = vld [vmem:[#allocation2 + $0xe0] sm:$0xff]
    %v41 = vld [vmem:[#allocation2 + $0xf0] sm:$0xff]
    %v42 = vld [vmem:[#allocation2 + $0x8] sm:$0xff]
    %v43 = vld [vmem:[#allocation2 + $0x18] sm:$0xff]
    %v44 = vld [vmem:[#allocation2 + $0x28] sm:$0xff]
    %v45 = vld [vmem:[#allocation2 + $0x38] sm:$0xff]
    %v46 = vld [vmem:[#allocation2 + $0x48] sm:$0xff]
    %v47 = vld [vmem:[#allocation2 + $0x58] sm:$0xff]
    %v48 = vld [vmem:[#allocation2 + $0x68] sm:$0xff]
    %v49 = vld [vmem:[#allocation2 + $0x78] sm:$0xff]
    %v50 = vld [vmem:[#allocation2 + $0x88] sm:$0xff]
    %v51 = vld [vmem:[#allocation2 + $0x98] sm:$0xff]
    %v52 = vld [vmem:[#allocation2 + $0xa8] sm:$0xff]
    %v53 = vld [vmem:[#allocation2 + $0xb8] sm:$0xff]
    %v54 = vld [vmem:[#allocation2 + $0xc8] sm:$0xff]
    %v55 = vld [vmem:[#allocation2 + $0xd8] sm:$0xff]
    %v56 = vld [vmem:[#allocation2 + $0xe8] sm:$0xff]
    %v57 = vld [vmem:[#allocation2 + $0xf8] sm:$0xff]
    %v58 = vld [vmem:[#allocation2 + $0x100] sm:$0xff]
    %v59 = vld [vmem:[#allocation2 + $0x110] sm:$0xff]
    %v60 = vld [vmem:[#allocation2 + $0x120] sm:$0xff]
    %v61 = vld [vmem:[#allocation2 + $0x130] sm:$0xff]
    %v62 = vld [vmem:[#allocation2 + $0x140] sm:$0xff]
    %v63 = vld [vmem:[#allocation2 + $0x150] sm:$0xff]
    %v64 = vld [vmem:[#allocation2 + $0x160] sm:$0xff]
    %v65 = vld [vmem:[#allocation2 + $0x170] sm:$0xff]
    %v66 = vld [vmem:[#allocation2 + $0x180] sm:$0xff]
    %v67 = vld [vmem:[#allocation2 + $0x190] sm:$0xff]
    %v68 = vld [vmem:[#allocation2 + $0x1a0] sm:$0xff]
    %v69 = vld [vmem:[#allocation2 + $0x1b0] sm:$0xff]
    %v70 = vld [vmem:[#allocation2 + $0x1c0] sm:$0xff]
    %v71 = vld [vmem:[#allocation2 + $0x1d0] sm:$0xff]
    %v72 = vld [vmem:[#allocation2 + $0x1e0] sm:$0xff]
    %v73 = vld [vmem:[#allocation2 + $0x1f0] sm:$0xff]
    %v74 = vld [vmem:[#allocation2 + $0x108] sm:$0xff]
    %v75 = vld [vmem:[#allocation2 + $0x118] sm:$0xff]
    %v76 = vld [vmem:[#allocation2 + $0x128] sm:$0xff]
    %v77 = vld [vmem:[#allocation2 + $0x138] sm:$0xff]
    %v78 = vld [vmem:[#allocation2 + $0x148] sm:$0xff]
    %v79 = vld [vmem:[#allocation2 + $0x158] sm:$0xff]
    %v80 = vld [vmem:[#allocation2 + $0x168] sm:$0xff]
    %v81 = vld [vmem:[#allocation2 + $0x178] sm:$0xff]
    %v82 = vld [vmem:[#allocation2 + $0x188] sm:$0xff]
    %v83 = vld [vmem:[#allocation2 + $0x198] sm:$0xff]
    %v84 = vld [vmem:[#allocation2 + $0x1a8] sm:$0xff]
    %v85 = vld [vmem:[#allocation2 + $0x1b8] sm:$0xff]
    %v86 = vld [vmem:[#allocation2 + $0x1c8] sm:$0xff]
    %v87 = vld [vmem:[#allocation2 + $0x1d8] sm:$0xff]
    %v88 = vld [vmem:[#allocation2 + $0x1e8] sm:$0xff]
    %v89 = vld [vmem:[#allocation2 + $0x1f8] sm:$0xff]
    %v90 = vld [vmem:[#allocation2 + $0x200] sm:$0xff]
    %v91 = vld [vmem:[#allocation2 + $0x208] sm:$0xff]
    %v92 = vld [vmem:[#allocation2 + $0x210] sm:$0xff]
    %v93 = vld [vmem:[#allocation2 + $0x218] sm:$0xff]
    %v94 = vld [vmem:[#allocation2 + $0x220] sm:$0xff]
    %v95 = vld [vmem:[#allocation2 + $0x228] sm:$0xff]
    %v96 = vld [vmem:[#allocation2 + $0x230] sm:$0xff]
    %v97 = vld [vmem:[#allocation2 + $0x238] sm:$0xff]
    %v98 = vld [vmem:[#allocation2 + $0x240] sm:$0xff]
    %v99 = vld [vmem:[#allocation2 + $0x248] sm:$0xff]
    %v100 = vld [vmem:[#allocation2 + $0x250] sm:$0xff]
    %v101 = vld [vmem:[#allocation2 + $0x258] sm:$0xff]
    %v102 = vld [vmem:[#allocation2 + $0x260] sm:$0xff]
    %v103 = vld [vmem:[#allocation2 + $0x268] sm:$0xff]
    %v104 = vld [vmem:[#allocation2 + $0x270] sm:$0xff]
    %v105 = vld [vmem:[#allocation2 + $0x278] sm:$0xff]
    %v106 = vld [vmem:[#allocation2 + $0x280] sm:$0xff]
    %v107 = vld [vmem:[#allocation2 + $0x288] sm:$0xff]
    %v108 = vld [vmem:[#allocation2 + $0x290] sm:$0xff]
    %v109 = vld [vmem:[#allocation2 + $0x298] sm:$0xff]
    %v110 = vld [vmem:[#allocation2 + $0x2a0] sm:$0xff]
    %v111 = vld [vmem:[#allocation2 + $0x2a8] sm:$0xff]
    %v112 = vld [vmem:[#allocation2 + $0x2b0] sm:$0xff]
    %v113 = vld [vmem:[#allocation2 + $0x2b8] sm:$0xff]
    %v114 = vld [vmem:[#allocation2 + $0x2c0] sm:$0xff]
    %v115 = vld [vmem:[#allocation2 + $0x2c8] sm:$0xff]
    %v116 = vld [vmem:[#allocation2 + $0x2d0] sm:$0xff]
    %v117 = vld [vmem:[#allocation2 + $0x2d8] sm:$0xff]
    %v118 = vld [vmem:[#allocation2 + $0x2e0] sm:$0xff]
    %v119 = vld [vmem:[#allocation2 + $0x2e8] sm:$0xff]
    %v120 = vld [vmem:[#allocation2 + $0x2f0] sm:$0xff]
    %v121 = vld [vmem:[#allocation2 + $0x2f8] sm:$0xff]
    %v122 = vld [vmem:[#allocation2 + $0x300] sm:$0xff]
    %v123 = vld [vmem:[#allocation2 + $0x308] sm:$0xff]
    %v124 = vld [vmem:[#allocation2 + $0x310] sm:$0xff]
    %v125 = vld [vmem:[#allocation2 + $0x320] sm:$0xff]
    %v126 = vld [vmem:[#allocation2 + $0x328] sm:$0xff]
    %127 = vmatprep.subr.mxu0 0.0
    %128 = vmatpush1.msra.mxu0 %v41
    %129 = vmatprep.subr.mxu0 0.0
    %130 = vmatpush1.msra.mxu0 %v40
    %131 = vmatprep.subr.mxu0 0.0
    %132 = vmatpush1.msra.mxu0 %v39
    %133 = vmatprep.subr.mxu0 0.0
    %134 = vmatpush1.msra.mxu0 %v38
    %135 = vmatprep.subr.mxu0 0.0
    %136 = vmatpush1.msra.mxu0 %v37
    %137 = vmatprep.subr.mxu0 0.0
    %138 = vmatpush1.msra.mxu0 %v36
    %139 = vmatprep.subr.mxu0 0.0
    %140 = vmatpush1.msra.mxu0 %v35
    %141 = vmatprep.subr.mxu0 0.0
    %142 = vmatpush1.msra.mxu0 %v34
    %143 = vmatprep.subr.mxu0 0.0
    %144 = vmatpush1.msra.mxu0 %v33
    %145 = vmatprep.subr.mxu0 0.0
    %146 = vmatpush1.msra.mxu0 %v32
    %147 = vmatprep.subr.mxu0 0.0
    %148 = vmatpush1.msra.mxu0 %v31
    %149 = vmatprep.subr.mxu0 0.0
    %150 = vmatpush1.msra.mxu0 %v30
    %151 = vmatprep.subr.mxu0 0.0
    %152 = vmatpush1.msra.mxu0 %v29
    %153 = vmatprep.subr.mxu0 0.0
    %154 = vmatpush1.msra.mxu0 %v28
    %155 = vmatprep.subr.mxu0 0.0
    %156 = vmatpush1.msra.mxu0 %v27
    %157 = vmatprep.subr.mxu0 0.0
    %158 = vmatpush1.msra.mxu0 %v26
    %159 = vmatprep.subr.mxu0 0.0
    %160 = vmatpush2.msra.mxu0 0.0
    %161 = vmatprep.subr.mxu0 0.0
    %162 = vmatpush2.msra.mxu0 0.0
    %163 = vmatprep.subr.mxu0 0.0
    %164 = vmatpush2.msra.mxu0 0.0
    %165 = vmatprep.subr.mxu0 0.0
    %166 = vmatpush2.msra.mxu0 0.0
    %167 = vmatprep.subr.mxu0 0.0
    %168 = vmatpush2.msra.mxu0 0.0
    %169 = vmatprep.subr.mxu0 0.0
    %170 = vmatpush2.msra.mxu0 0.0
    %171 = vmatprep.subr.mxu0 0.0
    %172 = vmatpush2.msra.mxu0 0.0
    %173 = vmatprep.subr.mxu0 0.0
    %174 = vmatpush2.msra.mxu0 0.0
    %175 = vmatprep.subr.mxu0 0.0
    %176 = vmatpush2.msra.mxu0 0.0
    %177 = vmatprep.subr.mxu0 0.0
    %178 = vmatpush2.msra.mxu0 0.0
    %179 = vmatprep.subr.mxu0 0.0
    %180 = vmatpush2.msra.mxu0 0.0
    %181 = vmatprep.subr.mxu0 0.0
    %182 = vmatpush2.msra.mxu0 0.0
    %183 = vmatprep.subr.mxu0 0.0
    %184 = vmatpush2.msra.mxu0 0.0
    %185 = vmatprep.subr.mxu0 0.0
    %186 = vmatpush2.msra.mxu0 0.0
    %187 = vmatprep.subr.mxu0 0.0
    %188 = vmatpush2.msra.mxu0 0.0
    %189 = vmatprep.subr.mxu0 0.0
    %190 = vmatpush2.msra.mxu0 0.0
    %191 = vmatprep.mubr.f32.mxu0 0.0
    %192 = vmatmul.mubr.f32.gmra.mxu0 %v25
    %v193 = vpop.f32.mrf.mxu0
    %v194 = vadd.f32 %v122, %v193
    %v195 = vpop.f32.mrf.mxu0
    %196 = vdwg.mxu0
    %v197 = vmax.f32 %v194, 0.0
    %198 = vmatprep.subr.mxu0 0.0
    %199 = vmatpush1.msra.mxu0 %v89
    %200 = vmatprep.subr.mxu0 0.0
    %201 = vmatpush1.msra.mxu0 %v88
    %202 = vmatprep.subr.mxu0 0.0
    %203 = vmatpush1.msra.mxu0 %v87
    %204 = vmatprep.subr.mxu0 0.0
    %205 = vmatpush1.msra.mxu0 %v86
    %206 = vmatprep.subr.mxu0 0.0
    %207 = vmatpush1.msra.mxu0 %v85
    %208 = vmatprep.subr.mxu0 0.0
    %209 = vmatpush1.msra.mxu0 %v84
    %210 = vmatprep.subr.mxu0 0.0
    %211 = vmatpush1.msra.mxu0 %v83
    %212 = vmatprep.subr.mxu0 0.0
    %213 = vmatpush1.msra.mxu0 %v82
    %214 = vmatprep.subr.mxu0 0.0
    %215 = vmatpush1.msra.mxu0 %v81
    %216 = vmatprep.subr.mxu0 0.0
    %217 = vmatpush1.msra.mxu0 %v80
    %218 = vmatprep.subr.mxu0 0.0
    %219 = vmatpush1.msra.mxu0 %v79
    %220 = vmatprep.subr.mxu0 0.0
    %221 = vmatpush1.msra.mxu0 %v78
    %222 = vmatprep.subr.mxu0 0.0
    %223 = vmatpush1.msra.mxu0 %v77
    %224 = vmatprep.subr.mxu0 0.0
    %225 = vmatpush1.msra.mxu0 %v76
    %226 = vmatprep.subr.mxu0 0.0
    %227 = vmatpush1.msra.mxu0 %v75
    %228 = vmatprep.subr.mxu0 0.0
    %229 = vmatpush1.msra.mxu0 %v74
    %230 = vmatprep.subr.mxu0 0.0
    %231 = vmatpush2.msra.mxu0 0.0
    %232 = vmatprep.subr.mxu0 0.0
    %233 = vmatpush2.msra.mxu0 0.0
    %234 = vmatprep.subr.mxu0 0.0
    %235 = vmatpush2.msra.mxu0 0.0
    %236 = vmatprep.subr.mxu0 0.0
    %237 = vmatpush2.msra.mxu0 0.0
    %238 = vmatprep.subr.mxu0 0.0
    %239 = vmatpush2.msra.mxu0 0.0
    %240 = vmatprep.subr.mxu0 0.0
    %241 = vmatpush2.msra.mxu0 0.0
    %242 = vmatprep.subr.mxu0 0.0
    %243 = vmatpush2.msra.mxu0 0.0
    %244 = vmatprep.subr.mxu0 0.0
    %245 = vmatpush2.msra.mxu0 0.0
    %246 = vmatprep.subr.mxu0 0.0
    %247 = vmatpush2.msra.mxu0 0.0
    %248 = vmatprep.subr.mxu0 0.0
    %249 = vmatpush2.msra.mxu0 0.0
    %250 = vmatprep.subr.mxu0 0.0
    %251 = vmatpush2.msra.mxu0 0.0
    %252 = vmatprep.subr.mxu0 0.0
    %253 = vmatpush2.msra.mxu0 0.0
    %254 = vmatprep.subr.mxu0 0.0
    %255 = vmatpush2.msra.mxu0 0.0
    %256 = vmatprep.subr.mxu0 0.0
    %257 = vmatpush2.msra.mxu0 0.0
    %258 = vmatprep.subr.mxu0 0.0
    %259 = vmatpush2.msra.mxu0 0.0
    %260 = vmatprep.subr.mxu0 0.0
    %261 = vmatpush2.msra.mxu0 0.0
    %262 = vmatprep.mubr.f32.mxu0 0.0
    %263 = vmatmul.mubr.f32.gmra.mxu0 %v197
    %v264 = vpop.f32.mrf.mxu0
    %v265 = vadd.f32 %v124, %v264
    %v266 = vpop.f32.mrf.mxu0
    %267 = vdwg.mxu0
    %268 = vmatprep.subr.mxu0 0.0
    %269 = vmatpush1.msra.mxu0 %v73
    %270 = vmatprep.subr.mxu0 0.0
    %271 = vmatpush1.msra.mxu0 %v72
    %272 = vmatprep.subr.mxu0 0.0
    %273 = vmatpush1.msra.mxu0 %v71
    %274 = vmatprep.subr.mxu0 0.0
    %275 = vmatpush1.msra.mxu0 %v70
    %276 = vmatprep.subr.mxu0 0.0
    %277 = vmatpush1.msra.mxu0 %v69
    %278 = vmatprep.subr.mxu0 0.0
    %279 = vmatpush1.msra.mxu0 %v68
    %280 = vmatprep.subr.mxu0 0.0
    %281 = vmatpush1.msra.mxu0 %v67
    %282 = vmatprep.subr.mxu0 0.0
    %283 = vmatpush1.msra.mxu0 %v66
    %284 = vmatprep.subr.mxu0 0.0
    %285 = vmatpush1.msra.mxu0 %v65
    %286 = vmatprep.subr.mxu0 0.0
    %287 = vmatpush1.msra.mxu0 %v64
    %288 = vmatprep.subr.mxu0 0.0
    %289 = vmatpush1.msra.mxu0 %v63
    %290 = vmatprep.subr.mxu0 0.0
    %291 = vmatpush1.msra.mxu0 %v62
    %292 = vmatprep.subr.mxu0 0.0
    %293 = vmatpush1.msra.mxu0 %v61
    %294 = vmatprep.subr.mxu0 0.0
    %295 = vmatpush1.msra.mxu0 %v60
    %296 = vmatprep.subr.mxu0 0.0
    %297 = vmatpush1.msra.mxu0 %v59
    %298 = vmatprep.subr.mxu0 0.0
    %299 = vmatpush1.msra.mxu0 %v58
    %300 = vmatprep.subr.mxu0 0.0
    %301 = vmatpush2.msra.mxu0 0.0
    %302 = vmatprep.subr.mxu0 0.0
    %303 = vmatpush2.msra.mxu0 0.0
    %304 = vmatprep.subr.mxu0 0.0
    %305 = vmatpush2.msra.mxu0 0.0
    %306 = vmatprep.subr.mxu0 0.0
    %307 = vmatpush2.msra.mxu0 0.0
    %308 = vmatprep.subr.mxu0 0.0
    %309 = vmatpush2.msra.mxu0 0.0
    %310 = vmatprep.subr.mxu0 0.0
    %311 = vmatpush2.msra.mxu0 0.0
    %312 = vmatprep.subr.mxu0 0.0
    %313 = vmatpush2.msra.mxu0 0.0
    %314 = vmatprep.subr.mxu0 0.0
    %315 = vmatpush2.msra.mxu0 0.0
    %316 = vmatprep.subr.mxu0 0.0
    %317 = vmatpush2.msra.mxu0 0.0
    %318 = vmatprep.subr.mxu0 0.0
    %319 = vmatpush2.msra.mxu0 0.0
    %320 = vmatprep.subr.mxu0 0.0
    %321 = vmatpush2.msra.mxu0 0.0
    %322 = vmatprep.subr.mxu0 0.0
    %323 = vmatpush2.msra.mxu0 0.0
    %324 = vmatprep.subr.mxu0 0.0
    %325 = vmatpush2.msra.mxu0 0.0
    %326 = vmatprep.subr.mxu0 0.0
    %327 = vmatpush2.msra.mxu0 0.0
    %328 = vmatprep.subr.mxu0 0.0
    %329 = vmatpush2.msra.mxu0 0.0
    %330 = vmatprep.subr.mxu0 0.0
    %331 = vmatpush2.msra.mxu0 0.0
    %332 = vmatprep.mubr.f32.mxu0 0.0
    %333 = vmatmul.mubr.f32.gmra.mxu0 %v265
    %v334 = vpop.f32.mrf.mxu0
    %v335 = vadd.f32 0.0, %v334
    %v336 = vpop.f32.mrf.mxu0
    %337 = vdwg.mxu0
    %338 = vmatprep.subr.mxu0 0.0
    %339 = vmatpush1.msra.mxu0 %v57
    %340 = vmatprep.subr.mxu0 0.0
    %341 = vmatpush1.msra.mxu0 %v56
    %342 = vmatprep.subr.mxu0 0.0
    %343 = vmatpush1.msra.mxu0 %v55
    %344 = vmatprep.subr.mxu0 0.0
    %345 = vmatpush1.msra.mxu0 %v54
    %346 = vmatprep.subr.mxu0 0.0
    %347 = vmatpush1.msra.mxu0 %v53
    %348 = vmatprep.subr.mxu0 0.0
    %349 = vmatpush1.msra.mxu0 %v52
    %350 = vmatprep.subr.mxu0 0.0
    %351 = vmatpush1.msra.mxu0 %v51
    %352 = vmatprep.subr.mxu0 0.0
    %353 = vmatpush1.msra.mxu0 %v50
    %354 = vmatprep.subr.mxu0 0.0
    %355 = vmatpush1.msra.mxu0 %v49
    %356 = vmatprep.subr.mxu0 0.0
    %357 = vmatpush1.msra.mxu0 %v48
    %358 = vmatprep.subr.mxu0 0.0
    %359 = vmatpush1.msra.mxu0 %v47
    %360 = vmatprep.subr.mxu0 0.0
    %361 = vmatpush1.msra.mxu0 %v46
    %362 = vmatprep.subr.mxu0 0.0
    %363 = vmatpush1.msra.mxu0 %v45
    %364 = vmatprep.subr.mxu0 0.0
    %365 = vmatpush1.msra.mxu0 %v44
    %366 = vmatprep.subr.mxu0 0.0
    %367 = vmatpush1.msra.mxu0 %v43
    %368 = vmatprep.subr.mxu0 0.0
    %369 = vmatpush1.msra.mxu0 %v42
    %370 = vmatprep.subr.mxu0 0.0
    %371 = vmatpush2.msra.mxu0 0.0
    %372 = vmatprep.subr.mxu0 0.0
    %373 = vmatpush2.msra.mxu0 0.0
    %374 = vmatprep.subr.mxu0 0.0
    %375 = vmatpush2.msra.mxu0 0.0
    %376 = vmatprep.subr.mxu0 0.0
    %377 = vmatpush2.msra.mxu0 0.0
    %378 = vmatprep.subr.mxu0 0.0
    %379 = vmatpush2.msra.mxu0 0.0
    %380 = vmatprep.subr.mxu0 0.0
    %381 = vmatpush2.msra.mxu0 0.0
    %382 = vmatprep.subr.mxu0 0.0
    %383 = vmatpush2.msra.mxu0 0.0
    %384 = vmatprep.subr.mxu0 0.0
    %385 = vmatpush2.msra.mxu0 0.0
    %386 = vmatprep.subr.mxu0 0.0
    %387 = vmatpush2.msra.mxu0 0.0
    %388 = vmatprep.subr.mxu0 0.0
    %389 = vmatpush2.msra.mxu0 0.0
    %390 = vmatprep.subr.mxu0 0.0
    %391 = vmatpush2.msra.mxu0 0.0
    %392 = vmatprep.subr.mxu0 0.0
    %393 = vmatpush2.msra.mxu0 0.0
    %394 = vmatprep.subr.mxu0 0.0
    %395 = vmatpush2.msra.mxu0 0.0
    %396 = vmatprep.subr.mxu0 0.0
    %397 = vmatpush2.msra.mxu0 0.0
    %398 = vmatprep.subr.mxu0 0.0
    %399 = vmatpush2.msra.mxu0 0.0
    %400 = vmatprep.subr.mxu0 0.0
    %401 = vmatpush2.msra.mxu0 0.0
    %402 = vmatprep.mubr.f32.mxu0 0.0
    %403 = vmatmul.mubr.f32.gmra.mxu0 %v25
    %v404 = vpop.f32.mrf.mxu0
    %v405 = vadd.f32 %v335, %v404
    %v406 = vpop.f32.mrf.mxu0
    %407 = vdwg.mxu0
    %v408 = vadd.f32 %v405, %v123
    %v409 = vmax.f32 %v408, 0.0
    %410 = vmatprep.subr.mxu0 %v121
    %411 = vmatpush1.msra.mxu0 %v120
    %412 = vmatprep.subr.mxu0 %v119
    %413 = vmatpush1.msra.mxu0 %v118
    %414 = vmatprep.subr.mxu0 %v117
    %415 = vmatpush1.msra.mxu0 %v116
    %416 = vmatprep.subr.mxu0 %v115
    %417 = vmatpush1.msra.mxu0 %v114
    %418 = vmatprep.subr.mxu0 %v113
    %419 = vmatpush1.msra.mxu0 %v112
    %420 = vmatprep.subr.mxu0 %v111
    %421 = vmatpush1.msra.mxu0 %v110
    %422 = vmatprep.subr.mxu0 %v109
    %423 = vmatpush1.msra.mxu0 %v108
    %424 = vmatprep.subr.mxu0 %v107
    %425 = vmatpush1.msra.mxu0 %v106
    %426 = vmatprep.subr.mxu0 %v105
    %427 = vmatpush1.msra.mxu0 %v104
    %428 = vmatprep.subr.mxu0 %v103
    %429 = vmatpush1.msra.mxu0 %v102
    %430 = vmatprep.subr.mxu0 %v101
    %431 = vmatpush1.msra.mxu0 %v100
    %432 = vmatprep.subr.mxu0 %v99
    %433 = vmatpush1.msra.mxu0 %v98
    %434 = vmatprep.subr.mxu0 %v97
    %435 = vmatpush1.msra.mxu0 %v96
    %436 = vmatprep.subr.mxu0 %v95
    %437 = vmatpush1.msra.mxu0 %v94
    %438 = vmatprep.subr.mxu0 %v93
    %439 = vmatpush1.msra.mxu0 %v92
    %440 = vmatprep.subr.mxu0 %v91
    %441 = vmatpush1.msra.mxu0 %v90
    %442 = vmatprep.subr.mxu0 0.0
    %443 = vmatpush2.msra.mxu0 0.0
    %444 = vmatprep.subr.mxu0 0.0
    %445 = vmatpush2.msra.mxu0 0.0
    %446 = vmatprep.subr.mxu0 0.0
    %447 = vmatpush2.msra.mxu0 0.0
    %448 = vmatprep.subr.mxu0 0.0
    %449 = vmatpush2.msra.mxu0 0.0
    %450 = vmatprep.subr.mxu0 0.0
    %451 = vmatpush2.msra.mxu0 0.0
    %452 = vmatprep.subr.mxu0 0.0
    %453 = vmatpush2.msra.mxu0 0.0
    %454 = vmatprep.subr.mxu0 0.0
    %455 = vmatpush2.msra.mxu0 0.0
    %456 = vmatprep.subr.mxu0 0.0
    %457 = vmatpush2.msra.mxu0 0.0
    %458 = vmatprep.subr.mxu0 0.0
    %459 = vmatpush2.msra.mxu0 0.0
    %460 = vmatprep.subr.mxu0 0.0
    %461 = vmatpush2.msra.mxu0 0.0
    %462 = vmatprep.subr.mxu0 0.0
    %463 = vmatpush2.msra.mxu0 0.0
    %464 = vmatprep.subr.mxu0 0.0
    %465 = vmatpush2.msra.mxu0 0.0
    %466 = vmatprep.subr.mxu0 0.0
    %467 = vmatpush2.msra.mxu0 0.0
    %468 = vmatprep.subr.mxu0 0.0
    %469 = vmatpush2.msra.mxu0 0.0
    %470 = vmatprep.subr.mxu0 0.0
    %471 = vmatpush2.msra.mxu0 0.0
    %472 = vmatprep.subr.mxu0 0.0
    %473 = vmatpush2.msra.mxu0 0.0
    %474 = vmatprep.mubr.f32.mxu0 0.0
    %475 = vmatmul.mubr.f32.gmra.mxu0 %v409
    %v476 = vpop.f32.mrf.mxu0
    %v477 = vadd.f32 %v125, %v476
    %v478 = vpop.f32.mrf.mxu0
    %v479 = vadd.f32 %v126, %v478
    %480 = vdwg.mxu0
    %481 = vst [vmem:[%s2] sm:$0xff] %v265
    %482 = vst [vmem:[%s2 + $0x8] sm:$0xff] %v477
    %483 = vst [vmem:[%s2 + $0x10] sm:$0xff] %v479
    // Predicated region
    $region14: #{ae_ab_parsec_forward.1} parent=1 // pred_check
      _
    $region15: #{ae_ab_parsec_forward.1} parent=1 // pred_check_branch
      %485 = sbr.rel (0) target = $region17
    $region16: #{ae_ab_parsec_forward.1} parent=1 // pred_region
      _
    $region17: #{ae_ab_parsec_forward.1} parent=1 // pred_fallthru
      _
    // Predicated region
    $region18: #{ae_ab_parsec_forward.1} parent=1 // pred_check
      _
    $region19: #{ae_ab_parsec_forward.1} parent=1 // pred_check_branch
      %487 = sbr.rel (0) target = $region21
    $region20: #{ae_ab_parsec_forward.1} parent=1 // pred_region
      _
    $region21: #{ae_ab_parsec_forward.1} parent=1 // pred_fallthru
      _
    %488 = vsyncpa [#allocation3], 1

</llo_original>
